<compile_context>
chip_gen: v5e
topology: v5e:2x2
jax: 0.10.0
libtpu: 0.0.40
codegen_flags: <defaults>
</compile_context>

<pallas_src>
import functools

import jax
import jax.numpy as jnp
from jax.experimental import pallas as pl
from jax.experimental.pallas import tpu as pltpu

DROPOUT_P = 0.2
# Drop iff bits < p * 2^32  (bits uniform over uint32)  =>  keep-prob = 1 - p.
_DROP_THRESHOLD = int(round(DROPOUT_P * (1 << 32)))  # 858993459


def _round_up(n, m):
    return ((n + m - 1) // m) * m


def mlp_kernel(x_ref, w1_ref, b1_ref, w2_ref, b2_ref, w3_ref, b3_ref,
               r1_ref, r2_ref, out_ref):
    """One batch tile of the 3-layer MLP with fused ReLU+dropout.

    Weights are pre-transposed to (in, out); W2/W3 already carry the 1.25
    dropout rescale, so dropout in-kernel is just a zeroing select.
    """
    thresh = jnp.uint32(_DROP_THRESHOLD)
    x = x_ref[...]

    # layer1 -> fused relu + dropout (integer keep-test, no scale multiply)
    pre1 = jnp.dot(x, w1_ref[...], preferred_element_type=jnp.float32) + b1_ref[...]
    keep1 = (r1_ref[...] >= thresh) & (pre1 > 0.0)
    y = jnp.where(keep1, pre1, 0.0)

    # layer2 -> fused relu + dropout
    pre2 = jnp.dot(y, w2_ref[...], preferred_element_type=jnp.float32) + b2_ref[...]
    keep2 = (r2_ref[...] >= thresh) & (pre2 > 0.0)
    z = jnp.where(keep2, pre2, 0.0)

    # layer3 (no activation)
    out = jnp.dot(z, w3_ref[...], preferred_element_type=jnp.float32) + b3_ref[...]
    out_ref[...] = out.astype(out_ref.dtype)


def prepare_params(params, p=DROPOUT_P):
    """One-time prep: transpose torch-style (out,in) weights to (in,out),
    reshape biases to (1,out), and fold the dropout 1/(1-p) scale into the
    weights *downstream* of each dropout (W2, W3).  Biases are NOT scaled:
    (s * (mask . y)) @ W + b  ==  (mask . y) @ (s * W) + b."""
    scale = jnp.float32(1.0 / (1.0 - p))
    return {
        "w1": params["w1"].T,
        "b1": params["b1"].reshape(1, -1),
        "w2": params["w2"].T * scale,
        "b2": params["b2"].reshape(1, -1),
        "w3": params["w3"].T * scale,
        "b3": params["b3"].reshape(1, -1),
    }


@jax.jit
def neural_net_forward(x, prepped, dropout_key):
    """x: (B, num_sensors) f32; prepped: output of prepare_params;
    dropout_key: fresh PRNG key per call (fresh masks each step)."""
    B, S = x.shape
    H1 = prepped["w1"].shape[1]
    H2 = prepped["w2"].shape[1]

    # Batch tile: multiple of 8 sublanes, capped at 128 rows per grid step.
    tb = min(128, _round_up(B, 8))
    Bp = _round_up(B, tb)
    if Bp > B:
        x = jnp.pad(x, ((0, Bp - B), (0, 0)))

    # Uniform uint32 bits for the two dropout layers (portable: no in-kernel
    # stateful PRNG, works on real TPU and in interpret mode).
    k1, k2 = jax.random.split(dropout_key)
    r1 = jax.random.bits(k1, (Bp, H1), dtype=jnp.uint32)
    r2 = jax.random.bits(k2, (Bp, H2), dtype=jnp.uint32)

    grid = (Bp // tb,)

    batch_spec = lambda cols: pl.BlockSpec((tb, cols), lambda i: (i, 0))
    resident = lambda shape: pl.BlockSpec(shape, lambda i: (0, 0))

    out = pl.pallas_call(
        mlp_kernel,
        out_shape=jax.ShapeDtypeStruct((Bp, S), jnp.float32),
        grid=grid,
        in_specs=[
            batch_spec(S),                     # x
            resident((S, H1)),                 # w1
            resident((1, H1)),                 # b1
            resident((H1, H2)),                # w2
            resident((1, H2)),                 # b2
            resident((H2, S)),                 # w3
            resident((1, S)),                  # b3
            batch_spec(H1),                    # dropout bits layer1
            batch_spec(H2),                    # dropout bits layer2
        ],
        out_specs=batch_spec(S),
        compiler_params=pltpu.CompilerParams(
            dimension_semantics=("parallel",)),
    )(x, prepped["w1"], prepped["b1"], prepped["w2"], prepped["b2"],
      prepped["w3"], prepped["b3"], r1, r2)

    return out[:B]


def init_params(key, num_sensors, hidden):
    """Deterministic init mimicking nn.Linear's U(-1/sqrt(fan_in), 1/sqrt(fan_in))."""
    h1, h2 = hidden
    ks = jax.random.split(key, 6)

    def uinit(k, shape, fan_in):
        bound = 1.0 / jnp.sqrt(jnp.float32(fan_in))
        return jax.random.uniform(k, shape, jnp.float32, -bound, bound)

    return {
        "w1": uinit(ks[0], (h1, num_sensors), num_sensors),
        "b1": uinit(ks[1], (h1,), num_sensors),
        "w2": uinit(ks[2], (h2, h1), h1),
        "b2": uinit(ks[3], (h2,), h1),
        "w3": uinit(ks[4], (num_sensors, h2), h2),
        "b3": uinit(ks[5], (num_sensors,), h2),
    }


if __name__ == "__main__":
    key = jax.random.PRNGKey(0)
    k_param, k_x, k_drop = jax.random.split(key, 3)

    batch = 8
    num_sensors = 16
    hidden = (32, 64)   # params[0], params[1]

    params = init_params(k_param, num_sensors, hidden)
    prepped = prepare_params(params)          # one-time: transposes + 1.25 fold
    x = jax.random.normal(k_x, (batch, num_sensors), dtype=jnp.float32)

    out = neural_net_forward(x, prepped, k_drop)
    jax.block_until_ready(out)

    assert out.shape == (batch, num_sensors)
    assert out.dtype == jnp.float32
    print("KERNEL_OK")
</pallas_src>

<mosaic_0001>
module attributes {stable_mosaic.version = 11 : i64} {
  func.func @mlp_kernel(%arg0: i32, %arg1: memref<8x16xf32, #tpu.memory_space<vmem>>, %arg2: memref<16x32xf32, #tpu.memory_space<vmem>>, %arg3: memref<1x32xf32, #tpu.memory_space<vmem>>, %arg4: memref<32x64xf32, #tpu.memory_space<vmem>>, %arg5: memref<1x64xf32, #tpu.memory_space<vmem>>, %arg6: memref<64x16xf32, #tpu.memory_space<vmem>>, %arg7: memref<1x16xf32, #tpu.memory_space<vmem>>, %arg8: memref<8x32xi32, #tpu.memory_space<vmem>>, %arg9: memref<8x64xi32, #tpu.memory_space<vmem>>, %arg10: memref<8x16xf32, #tpu.memory_space<vmem>>) attributes {dimension_semantics = [#tpu.dimension_semantics<parallel>], iteration_bounds = array<i64: 1>, scalar_prefetch = 0 : i64, scratch_operands = 0 : i64, tpu.core_type = #tpu.core_type<tc>, window_params = [{transform_indices = @transform_0, window_bounds = array<i64: 8, 16>}, {pipeline_mode = #tpu.pipeline_mode<synchronous>, transform_indices = @transform_1, window_bounds = array<i64: 16, 32>}, {pipeline_mode = #tpu.pipeline_mode<synchronous>, transform_indices = @transform_2, window_bounds = array<i64: 1, 32>}, {pipeline_mode = #tpu.pipeline_mode<synchronous>, transform_indices = @transform_3, window_bounds = array<i64: 32, 64>}, {pipeline_mode = #tpu.pipeline_mode<synchronous>, transform_indices = @transform_4, window_bounds = array<i64: 1, 64>}, {pipeline_mode = #tpu.pipeline_mode<synchronous>, transform_indices = @transform_5, window_bounds = array<i64: 64, 16>}, {pipeline_mode = #tpu.pipeline_mode<synchronous>, transform_indices = @transform_6, window_bounds = array<i64: 1, 16>}, {transform_indices = @transform_7, window_bounds = array<i64: 8, 32>}, {transform_indices = @transform_8, window_bounds = array<i64: 8, 64>}, {transform_indices = @transform_9, window_bounds = array<i64: 8, 16>}]} {
    %c0 = arith.constant 0 : index
    %c0_0 = arith.constant 0 : index
    %0 = vector.load %arg1[%c0, %c0_0] : memref<8x16xf32, #tpu.memory_space<vmem>>, vector<8x16xf32>
    %c0_1 = arith.constant 0 : index
    %c0_2 = arith.constant 0 : index
    %1 = vector.load %arg2[%c0_1, %c0_2] : memref<16x32xf32, #tpu.memory_space<vmem>>, vector<16x32xf32>
    %cst = arith.constant dense<0.000000e+00> : vector<8x32xf32>
    %2 = tpu.matmul %0, %1, %cst {dimension_numbers = #tpu.dot_dimension_numbers<[1], [0], [0], [1], [0, 0, 1, 1], [], []>} : vector<8x16xf32>, vector<16x32xf32>, vector<8x32xf32> -> vector<8x32xf32>
    %c0_3 = arith.constant 0 : index
    %c0_4 = arith.constant 0 : index
    %3 = vector.load %arg3[%c0_3, %c0_4] : memref<1x32xf32, #tpu.memory_space<vmem>>, vector<1x32xf32>
    %4 = vector.broadcast %3 : vector<1x32xf32> to vector<8x32xf32>
    %5 = arith.addf %2, %4 : vector<8x32xf32>
    %c0_5 = arith.constant 0 : index
    %c0_6 = arith.constant 0 : index
    %6 = vector.load %arg8[%c0_5, %c0_6] : memref<8x32xi32, #tpu.memory_space<vmem>>, vector<8x32xi32>
    %c858993459_i32 = arith.constant 858993459 : i32
    %7 = vector.broadcast %c858993459_i32 : i32 to vector<8x32xi32>
    %8 = arith.cmpi uge, %6, %7 : vector<8x32xi32>
    %cst_7 = arith.constant 0.000000e+00 : f32
    %9 = vector.broadcast %cst_7 : f32 to vector<8x32xf32>
    %10 = arith.cmpf ogt, %5, %9 : vector<8x32xf32>
    %11 = arith.andi %8, %10 : vector<8x32xi1>
    %cst_8 = arith.constant 0.000000e+00 : f32
    %12 = vector.broadcast %cst_8 : f32 to vector<8x32xf32>
    %13 = arith.select %11, %5, %12 : vector<8x32xi1>, vector<8x32xf32>
    %c0_9 = arith.constant 0 : index
    %c0_10 = arith.constant 0 : index
    %14 = vector.load %arg4[%c0_9, %c0_10] : memref<32x64xf32, #tpu.memory_space<vmem>>, vector<32x64xf32>
    %cst_11 = arith.constant dense<0.000000e+00> : vector<8x64xf32>
    %15 = tpu.matmul %13, %14, %cst_11 {dimension_numbers = #tpu.dot_dimension_numbers<[1], [0], [0], [1], [0, 0, 1, 1], [], []>} : vector<8x32xf32>, vector<32x64xf32>, vector<8x64xf32> -> vector<8x64xf32>
    %c0_12 = arith.constant 0 : index
    %c0_13 = arith.constant 0 : index
    %16 = vector.load %arg5[%c0_12, %c0_13] : memref<1x64xf32, #tpu.memory_space<vmem>>, vector<1x64xf32>
    %17 = vector.broadcast %16 : vector<1x64xf32> to vector<8x64xf32>
    %18 = arith.addf %15, %17 : vector<8x64xf32>
    %c0_14 = arith.constant 0 : index
    %c0_15 = arith.constant 0 : index
    %19 = vector.load %arg9[%c0_14, %c0_15] : memref<8x64xi32, #tpu.memory_space<vmem>>, vector<8x64xi32>
    %c858993459_i32_16 = arith.constant 858993459 : i32
    %20 = vector.broadcast %c858993459_i32_16 : i32 to vector<8x64xi32>
    %21 = arith.cmpi uge, %19, %20 : vector<8x64xi32>
    %cst_17 = arith.constant 0.000000e+00 : f32
    %22 = vector.broadcast %cst_17 : f32 to vector<8x64xf32>
    %23 = arith.cmpf ogt, %18, %22 : vector<8x64xf32>
    %24 = arith.andi %21, %23 : vector<8x64xi1>
    %cst_18 = arith.constant 0.000000e+00 : f32
    %25 = vector.broadcast %cst_18 : f32 to vector<8x64xf32>
    %26 = arith.select %24, %18, %25 : vector<8x64xi1>, vector<8x64xf32>
    %c0_19 = arith.constant 0 : index
    %c0_20 = arith.constant 0 : index
    %27 = vector.load %arg6[%c0_19, %c0_20] : memref<64x16xf32, #tpu.memory_space<vmem>>, vector<64x16xf32>
    %cst_21 = arith.constant dense<0.000000e+00> : vector<8x16xf32>
    %28 = tpu.matmul %26, %27, %cst_21 {dimension_numbers = #tpu.dot_dimension_numbers<[1], [0], [0], [1], [0, 0, 1, 1], [], []>} : vector<8x64xf32>, vector<64x16xf32>, vector<8x16xf32> -> vector<8x16xf32>
    %c0_22 = arith.constant 0 : index
    %c0_23 = arith.constant 0 : index
    %29 = vector.load %arg7[%c0_22, %c0_23] : memref<1x16xf32, #tpu.memory_space<vmem>>, vector<1x16xf32>
    %30 = vector.broadcast %29 : vector<1x16xf32> to vector<8x16xf32>
    %31 = arith.addf %28, %30 : vector<8x16xf32>
    %c0_24 = arith.constant 0 : index
    %c0_25 = arith.constant 0 : index
    %32 = vector.load %arg10[%c0_24, %c0_25] : memref<8x16xf32, #tpu.memory_space<vmem>>, vector<8x16xf32>
    tpu.vector_store %arg10[%c0_24, %c0_25], %31 {strides = array<i32>} : memref<8x16xf32, #tpu.memory_space<vmem>>, vector<8x16xf32>,
    return
  }
  func.func @transform_0(%arg0: i32) -> (i32, i32) {
    %c0_i32 = arith.constant 0 : i32
    %c0_i32_0 = arith.constant 0 : i32
    return %arg0, %c0_i32 : i32, i32
  }
  func.func @transform_1(%arg0: i32) -> (i32, i32) {
    %c0_i32 = arith.constant 0 : i32
    %c0_i32_0 = arith.constant 0 : i32
    %c0_i32_1 = arith.constant 0 : i32
    return %c0_i32, %c0_i32_0 : i32, i32
  }
  func.func @transform_2(%arg0: i32) -> (i32, i32) {
    %c0_i32 = arith.constant 0 : i32
    %c0_i32_0 = arith.constant 0 : i32
    %c0_i32_1 = arith.constant 0 : i32
    return %c0_i32, %c0_i32_0 : i32, i32
  }
  func.func @transform_3(%arg0: i32) -> (i32, i32) {
    %c0_i32 = arith.constant 0 : i32
    %c0_i32_0 = arith.constant 0 : i32
    %c0_i32_1 = arith.constant 0 : i32
    return %c0_i32, %c0_i32_0 : i32, i32
  }
  func.func @transform_4(%arg0: i32) -> (i32, i32) {
    %c0_i32 = arith.constant 0 : i32
    %c0_i32_0 = arith.constant 0 : i32
    %c0_i32_1 = arith.constant 0 : i32
    return %c0_i32, %c0_i32_0 : i32, i32
  }
  func.func @transform_5(%arg0: i32) -> (i32, i32) {
    %c0_i32 = arith.constant 0 : i32
    %c0_i32_0 = arith.constant 0 : i32
    %c0_i32_1 = arith.constant 0 : i32
    return %c0_i32, %c0_i32_0 : i32, i32
  }
  func.func @transform_6(%arg0: i32) -> (i32, i32) {
    %c0_i32 = arith.constant 0 : i32
    %c0_i32_0 = arith.constant 0 : i32
    %c0_i32_1 = arith.constant 0 : i32
    return %c0_i32, %c0_i32_0 : i32, i32
  }
  func.func @transform_7(%arg0: i32) -> (i32, i32) {
    %c0_i32 = arith.constant 0 : i32
    %c0_i32_0 = arith.constant 0 : i32
    return %arg0, %c0_i32 : i32, i32
  }
  func.func @transform_8(%arg0: i32) -> (i32, i32) {
    %c0_i32 = arith.constant 0 : i32
    %c0_i32_0 = arith.constant 0 : i32
    return %arg0, %c0_i32 : i32, i32
  }
  func.func @transform_9(%arg0: i32) -> (i32, i32) {
    %c0_i32 = arith.constant 0 : i32
    %c0_i32_0 = arith.constant 0 : i32
    return %arg0, %c0_i32 : i32, i32
  }
}

</mosaic_0001>

<llo_original>
// kernel: neural_net_forward.3
$region0: #{neural_net_forward.3}
  #allocation0 [shape = 'u32[]', space=smem, size = 0x4, offset = 0x4, fixed_abs, tag = 'smem constant byte address 0x4 - core index']
  #allocation1 [shape = 'u32[72,128]{1,0:T(1,128)}', space=vmem, size = 0x9000, scoped, tag = 'internal scratch']
  %s0 = inlined_call_operand.vmem [shape: f32[8,16], index: 0, kind: input, shape index: {}]
  %s1 = inlined_call_operand.vmem [shape: f32[16,32], index: 1, kind: input, shape index: {}]
  %s2 = inlined_call_operand.vmem [shape: f32[1,32], index: 2, kind: input, shape index: {}]
  %s3 = inlined_call_operand.vmem [shape: f32[32,64], index: 3, kind: input, shape index: {}]
  %s4 = inlined_call_operand.vmem [shape: f32[1,64], index: 4, kind: input, shape index: {}]
  %s5 = inlined_call_operand.vmem [shape: f32[64,16], index: 5, kind: input, shape index: {}]
  %s6 = inlined_call_operand.vmem [shape: f32[1,16], index: 6, kind: input, shape index: {}]
  %s7 = inlined_call_operand.vmem [shape: u32[8,32], index: 7, kind: input, shape index: {}]
  %s8 = inlined_call_operand.vmem [shape: u32[8,64], index: 8, kind: input, shape index: {}]
  %s9 = inlined_call_operand.hbm [shape: f32[8,16], index: 9, kind: output, shape index: {}]
  %s10 = sld [smem:[#allocation0]]
  $region46: #{neural_net_forward.3} parent=0
    _
  %s12 = ssub.s32 1, %s10
  %s13 = scalar_select 0, %s12, %s10
  $region1: #{neural_net_forward.3} parent=0
    #allocation2 [shape = 'u8[4096]{0}', space=vmem, size = 0x1000, scoped, tag = 'output window, operand 0, single buffered']
    #allocation3 [shape = 's32[1]{0}', space=sflag, size = 0x4, scoped, tag = 'scoped memory for neural_net_forward.3']
    %14 = vsyncpa [#allocation3], 0
    // Predicated region
    $region2: #{neural_net_forward.3} parent=1 // pred_check
      _
    $region3: #{neural_net_forward.3} parent=1 // pred_check_branch
      %16 = sbr.rel (0) target = $region5
    $region4: #{neural_net_forward.3} parent=1 // pred_region
      _
    $region5: #{neural_net_forward.3} parent=1 // pred_fallthru
      _
    // Predicated region
    $region6: #{neural_net_forward.3} parent=1 // pred_check
      _
    $region7: #{neural_net_forward.3} parent=1 // pred_check_branch
      %18 = sbr.rel (0) target = $region9
    $region8: #{neural_net_forward.3} parent=1 // pred_region
      _
    $region9: #{neural_net_forward.3} parent=1 // pred_fallthru
      _
    // Predicated region
    $region10: #{neural_net_forward.3} parent=1 // pred_check
      _
    $region11: #{neural_net_forward.3} parent=1 // pred_check_branch
      %20 = sbr.rel (0) target = $region13
    $region12: #{neural_net_forward.3} parent=1 // pred_region
      _
    $region13: #{neural_net_forward.3} parent=1 // pred_fallthru
      _
    // Predicated region
    $region14: #{neural_net_forward.3} parent=1 // pred_check
      _
    $region15: #{neural_net_forward.3} parent=1 // pred_check_branch
      %22 = sbr.rel (0) target = $region17
    $region16: #{neural_net_forward.3} parent=1 // pred_region
      _
    $region17: #{neural_net_forward.3} parent=1 // pred_fallthru
      _
    // Predicated region
    $region18: #{neural_net_forward.3} parent=1 // pred_check
      _
    $region19: #{neural_net_forward.3} parent=1 // pred_check_branch
      %24 = sbr.rel (0) target = $region21
    $region20: #{neural_net_forward.3} parent=1 // pred_region
      _
    $region21: #{neural_net_forward.3} parent=1 // pred_fallthru
      _
    // Predicated region
    $region22: #{neural_net_forward.3} parent=1 // pred_check
      _
    $region23: #{neural_net_forward.3} parent=1 // pred_check_branch
      %26 = sbr.rel (0) target = $region25
    $region24: #{neural_net_forward.3} parent=1 // pred_region
      _
    $region25: #{neural_net_forward.3} parent=1 // pred_fallthru
      _
    // Predicated region
    $region26: #{neural_net_forward.3} parent=1 // pred_check
      _
    $region27: #{neural_net_forward.3} parent=1 // pred_check_branch
      %28 = sbr.rel (0) target = $region29
    $region28: #{neural_net_forward.3} parent=1 // pred_region
      _
    $region29: #{neural_net_forward.3} parent=1 // pred_fallthru
      _
    // Predicated region
    $region30: #{neural_net_forward.3} parent=1 // pred_check
      _
    $region31: #{neural_net_forward.3} parent=1 // pred_check_branch
      %30 = sbr.rel (0) target = $region33
    $region32: #{neural_net_forward.3} parent=1 // pred_region
      _
    $region33: #{neural_net_forward.3} parent=1 // pred_fallthru
      _
    // Predicated region
    $region34: #{neural_net_forward.3} parent=1 // pred_check
      _
    $region35: #{neural_net_forward.3} parent=1 // pred_check_branch
      %32 = sbr.rel (0) target = $region37
    $region36: #{neural_net_forward.3} parent=1 // pred_region
      _
    $region37: #{neural_net_forward.3} parent=1 // pred_fallthru
      _
    %v33 = vld [vmem:[%s0] sm:$0xff]
    %v34 = vld [vmem:[%s1] sm:$0xff]
    %v35 = vld [vmem:[%s1 + $0x8] sm:$0xff]
    %v36 = vld [vmem:[%s2] sm:$0x1]
    %v38 = vperm.slane %v36, 0
    %vm40 = vcmask 130048
    %v42 = vsel %vm40, %v33, 0
    %44 = vmatpush.msra.mxu0 0.0
    %45 = vmatpush.msra.mxu0 0.0
    %46 = vmatpush.msra.mxu0 0.0
    %47 = vmatpush.msra.mxu0 0.0
    %48 = vmatpush.msra.mxu0 0.0
    %49 = vmatpush.msra.mxu0 0.0
    %50 = vmatpush.msra.mxu0 0.0
    %51 = vmatpush.msra.mxu0 0.0
    %52 = vmatpush.msra.mxu0 0.0
    %53 = vmatpush.msra.mxu0 0.0
    %54 = vmatpush.msra.mxu0 0.0
    %55 = vmatpush.msra.mxu0 0.0
    %56 = vmatpush.msra.mxu0 0.0
    %57 = vmatpush.msra.mxu0 0.0
    %58 = vmatpush.msra.mxu0 %v35
    %59 = vmatpush.msra.mxu0 %v34
    %60 = vmatmul.f32.gmra.mxu0 %v42
    %v61 = vpop.f32.mrf.mxu0
    %v62 = vadd.f32 %v38, %v61
    %63 = vdwg.mxu0
    %v64 = vld [vmem:[%s7] sm:$0xff]
    %v65 = vadd.s32 %v64, 2147483648
    %vm67 = vcmp.ge.s32.totalorder %v65, 3006477107
    %vm68 = vcmp.gt.f32.partialorder %v62, 0.0
    %vm69 = vmand %vm67, %vm68
    %v70 = vsel %vm69, %v62, 0.0
    %v71 = vld [vmem:[%s3] sm:$0xff]
    %v72 = vld [vmem:[%s3 + $0x8] sm:$0xff]
    %v73 = vld [vmem:[%s3 + $0x10] sm:$0xff]
    %v74 = vld [vmem:[%s3 + $0x18] sm:$0xff]
    %v75 = vld [vmem:[%s4] sm:$0x1]
    %v77 = vperm.slane %v75, 0
    %vm79 = vcmask 261120
    %v81 = vsel %vm79, %v70, 0
    %83 = vmatpush.msra.mxu0 0.0
    %84 = vmatpush.msra.mxu0 0.0
    %85 = vmatpush.msra.mxu0 0.0
    %86 = vmatpush.msra.mxu0 0.0
    %87 = vmatpush.msra.mxu0 0.0
    %88 = vmatpush.msra.mxu0 0.0
    %89 = vmatpush.msra.mxu0 0.0
    %90 = vmatpush.msra.mxu0 0.0
    %91 = vmatpush.msra.mxu0 0.0
    %92 = vmatpush.msra.mxu0 0.0
    %93 = vmatpush.msra.mxu0 0.0
    %94 = vmatpush.msra.mxu0 0.0
    %95 = vmatpush.msra.mxu0 %v74
    %96 = vmatpush.msra.mxu0 %v73
    %97 = vmatpush.msra.mxu0 %v72
    %98 = vmatpush.msra.mxu0 %v71
    %99 = vmatmul.f32.gmra.mxu0 %v81
    %v100 = vpop.f32.mrf.mxu0
    %v101 = vadd.f32 %v77, %v100
    %102 = vdwg.mxu0
    %v103 = vld [vmem:[%s8] sm:$0xff]
    %v104 = vadd.s32 %v103, 2147483648
    %vm106 = vcmp.ge.s32.totalorder %v104, 3006477107
    %vm107 = vcmp.gt.f32.partialorder %v101, 0.0
    %vm108 = vmand %vm106, %vm107
    %v109 = vsel %vm108, %v101, 0.0
    %v110 = vld [vmem:[%s5] sm:$0xff]
    %v111 = vld [vmem:[%s5 + $0x8] sm:$0xff]
    %v112 = vld [vmem:[%s5 + $0x10] sm:$0xff]
    %v113 = vld [vmem:[%s5 + $0x18] sm:$0xff]
    %v114 = vld [vmem:[%s5 + $0x20] sm:$0xff]
    %v115 = vld [vmem:[%s5 + $0x28] sm:$0xff]
    %v116 = vld [vmem:[%s5 + $0x30] sm:$0xff]
    %v117 = vld [vmem:[%s5 + $0x38] sm:$0xff]
    %v118 = vld [vmem:[%s6] sm:$0x1]
    %v120 = vperm.slane %v118, 0
    %vm122 = vcmask 523264
    %v124 = vsel %vm122, %v109, 0
    %126 = vmatpush.msra.mxu0 0.0
    %127 = vmatpush.msra.mxu0 0.0
    %128 = vmatpush.msra.mxu0 0.0
    %129 = vmatpush.msra.mxu0 0.0
    %130 = vmatpush.msra.mxu0 0.0
    %131 = vmatpush.msra.mxu0 0.0
    %132 = vmatpush.msra.mxu0 0.0
    %133 = vmatpush.msra.mxu0 0.0
    %134 = vmatpush.msra.mxu0 %v117
    %135 = vmatpush.msra.mxu0 %v116
    %136 = vmatpush.msra.mxu0 %v115
    %137 = vmatpush.msra.mxu0 %v114
    %138 = vmatpush.msra.mxu0 %v113
    %139 = vmatpush.msra.mxu0 %v112
    %140 = vmatpush.msra.mxu0 %v111
    %141 = vmatpush.msra.mxu0 %v110
    %142 = vmatmul.f32.gmra.mxu0 %v124
    %v143 = vpop.f32.mrf.mxu0
    %v144 = vadd.f32 %v120, %v143
    %145 = vdwg.mxu0
    %146 = vst.msk [vmem:[#allocation2] sm:$0xff] %vm40, %v144
    // Predicated region
    $region38: #{neural_net_forward.3} parent=1 // pred_check
      _
    $region39: #{neural_net_forward.3} parent=1 // pred_check_branch
      %148 = sbr.rel (0) target = $region41
    $region40: #{neural_net_forward.3} parent=1 // pred_region
      %150 = vsyncadd [#allocation3], 0
      %s152 = sshll.u32 [#allocation2], 4
      %s153 = int_to_ptr.vmem [resolvable:$true] %s152
      %s154 = sshll.u32 %s9, 4
      %s155 = int_to_ptr.hbm [resolvable:$true] %s154
      %157 = dma.vmem_to_hbm [thread:$0]  %s153, 128, %s155, [#allocation3]
    $region41: #{neural_net_forward.3} parent=1 // pred_fallthru
      _
    // Predicated region
    $region42: #{neural_net_forward.3} parent=1 // pred_check
      _
    $region43: #{neural_net_forward.3} parent=1 // pred_check_branch
      %159 = sbr.rel (0) target = $region45
    $region44: #{neural_net_forward.3} parent=1 // pred_region
      %161 = dma.done [#allocation3], 128
    $region45: #{neural_net_forward.3} parent=1 // pred_fallthru
      _
    %162 = vsyncpa [#allocation3], 1

</llo_original>
